<compile_context>
chip_gen: v7x
topology: tpu7x:2x2x1
jax: 0.10.0
libtpu: 0.0.40
codegen_flags: <defaults>
</compile_context>

<pallas_src>
import functools
import math

import jax
import jax.numpy as jnp
from jax.experimental import pallas as pl
from jax.experimental.pallas import tpu as pltpu


def _round_up(v, m):
    return ((v + m - 1) // m) * m


def _make_slabs(x, *, freq_bands, include_input, periodic_fns,
                use_double_angle, reseed_every):
    """Build the list of (input_dim, c) slabs in the torch concat order."""
    slabs = []
    if include_input:
        slabs.append(x)
    if use_double_angle:
        s = c = None
        for k, f in enumerate(freq_bands):          # compile-time unrolled
            if k % reseed_every == 0:
                xf = x if f == 1.0 else x * jnp.float32(f)
                s, c = jnp.sin(xf), jnp.cos(xf)      # exact re-seed
            else:
                # f_k = 2 * f_{k-1}: derive with cheap VPU ops.
                s, c = 2.0 * (s * c), 1.0 - 2.0 * (s * s)
            slabs.append(s)
            slabs.append(c)
    else:
        for f in freq_bands:                         # compile-time unrolled
            xf = x if f == 1.0 else x * jnp.float32(f)
            for p_fn in periodic_fns:                # default: (sin, cos)
                slabs.append(p_fn(xf))
    return slabs


def _freq_encode_cl_kernel(x_ref, o_ref, **cfg):
    # channels_last path: x (input_dim, c) lane-dense -> o (c, output_dim).
    x = x_ref[...].astype(jnp.float32)
    slabs = _make_slabs(x, **cfg)
    # The fused transpose consumes the whole tile, so we assemble it once; the
    # intermediate is VMEM-resident and the transpose (XLU) + store hide under
    # the output DMA for the mem-bound regime.
    tile = slabs[0] if len(slabs) == 1 else jnp.concatenate(slabs, axis=0)
    # ONE store, directly in the final (..., output_dim) layout: the 9-10x
    # larger output crosses HBM exactly once (no XLA transpose pass).
    o_ref[...] = tile.T.astype(o_ref.dtype)


def _freq_encode_cf_kernel(x_ref, o_ref, **cfg):
    # channel-first path: x (input_dim, c) -> o (n_slabs, input_dim, c).
    x = x_ref[...].astype(jnp.float32)
    slabs = _make_slabs(x, **cfg)
    for k, slab in enumerate(slabs):
        # Per-slab, tile-aligned, lane-dense store: bounded live ranges and no
        # sublane-misaligned concatenate.
        o_ref[k] = slab.astype(o_ref.dtype)


class FreqEncoder:
    """JAX/Pallas port of the PyTorch FreqEncoder module."""

    def __init__(self, input_dim, max_freq_log2, N_freqs, log_sampling=True,
                 include_input=True, periodic_fns=(jnp.sin, jnp.cos),
                 use_double_angle=True, reseed_every=4):
        self.input_dim = input_dim
        self.include_input = include_input
        self.periodic_fns = tuple(periodic_fns)
        self.reseed_every = max(1, int(reseed_every))

        self.output_dim = 0
        if include_input:
            self.output_dim += input_dim
        self.output_dim += input_dim * N_freqs * len(self.periodic_fns)
        self.n_slabs = self.output_dim // input_dim

        # freq_bands as python floats, like torch's linspace(...).tolist(),
        # baked in as compile-time constants.
        if log_sampling:
            if N_freqs == 1:
                self.freq_bands = [2.0 ** 0.0]
            else:
                self.freq_bands = [
                    2.0 ** (max_freq_log2 * i / (N_freqs - 1)) for i in range(N_freqs)
                ]
        else:
            lo, hi = 2.0 ** 0.0, 2.0 ** max_freq_log2
            if N_freqs == 1:
                self.freq_bands = [lo]
            else:
                self.freq_bands = [
                    lo + (hi - lo) * i / (N_freqs - 1) for i in range(N_freqs)
                ]

        # Double-angle recurrence only valid for (sin, cos) with exact
        # integer-doubling bands; otherwise fall back to direct sin/cos.
        doubling_ok = (
            len(self.periodic_fns) == 2
            and self.periodic_fns[0] is jnp.sin
            and self.periodic_fns[1] is jnp.cos
            and len(self.freq_bands) >= 1
            and all(self.freq_bands[i + 1] == 2.0 * self.freq_bands[i]
                    for i in range(len(self.freq_bands) - 1))
        )
        self.use_double_angle = bool(use_double_angle) and doubling_ok

    def __call__(self, x, *, block_cols=8192, out_dtype=None, channels_last=True):
        """channels_last=True (default) matches the PyTorch layout
        (..., output_dim).  channels_last=False returns (output_dim, *batch)
        with zero transposes anywhere (fastest if the consumer accepts it).
        out_dtype=jnp.bfloat16 halves the dominant HBM writeback (compute
        stays f32); default keeps the input dtype."""
        orig_shape = x.shape
        assert orig_shape[-1] == self.input_dim
        n = int(math.prod(orig_shape[:-1]))
        out_dtype = jnp.dtype(x.dtype if out_dtype is None else out_dtype)

        # Points on the lane axis (channel-first compute).  This wrapper-side
        # transpose only touches the small input (~1/9 of total traffic); the
        # output-side transpose is fused into the kernel.
        x_t = x.reshape(n, self.input_dim).T               # (input_dim, n)

        # Lane-dense tile width (multiple of 128).
        n_pad = _round_up(n, 128)
        c = max(128, min((int(block_cols) // 128) * 128, n_pad))
        # v7x has 2 TensorCores: force >= 2 grid steps when there is enough
        # work so ("parallel",) can shard across them.
        if n_pad > 256 and pl.cdiv(n, c) < 2:
            c = max(128, _round_up(pl.cdiv(n, 2), 128))
        grid = (pl.cdiv(n, c),)                             # ragged tail masked by Pallas

        kernel_cfg = dict(
            freq_bands=tuple(self.freq_bands),
            include_input=self.include_input,
            periodic_fns=self.periodic_fns,
            use_double_angle=self.use_double_angle,
            reseed_every=self.reseed_every,
        )

        # Scoped-VMEM budget: double-buffered blocks + intermediates (padded to
        # the (8,128) tiling).  v5e's 16 MiB scoped default is too small for
        # c >= 8192, so set it explicitly; clamp to v7x's 64 MiB physical.
        in_bytes = 2 * _round_up(self.input_dim, 8) * c * x.dtype.itemsize
        if channels_last:
            out_bytes = 2 * c * _round_up(self.output_dim, 128) * out_dtype.itemsize
            scratch = c * (_round_up(self.output_dim, 8)
                           + _round_up(self.output_dim, 128)) * 4
        else:
            out_bytes = (2 * self.n_slabs * _round_up(self.input_dim, 8)
                         * c * out_dtype.itemsize)
            scratch = self.n_slabs * _round_up(self.input_dim, 8) * c * 4
        vmem_limit = int(min(max((in_bytes + out_bytes + scratch) * 5 // 4
                                 + (4 << 20), 32 << 20), 64 << 20))

        cost = pl.CostEstimate(
            flops=8 * n * self.output_dim,
            transcendentals=n * self.input_dim * len(self.freq_bands)
                            * len(self.periodic_fns),
            bytes_accessed=n * (self.input_dim * x.dtype.itemsize
                                + self.output_dim * out_dtype.itemsize),
        )
        compiler_params = pltpu.CompilerParams(
            dimension_semantics=("parallel",), vmem_limit_bytes=vmem_limit)

        in_specs = [pl.BlockSpec((self.input_dim, c), lambda i: (0, i))]

        if channels_last:
            out2d = pl.pallas_call(
                functools.partial(_freq_encode_cl_kernel, **kernel_cfg),
                out_shape=jax.ShapeDtypeStruct((n, self.output_dim), out_dtype),
                grid_spec=pltpu.PrefetchScalarGridSpec(
                    num_scalar_prefetch=0, grid=grid, in_specs=in_specs,
                    out_specs=pl.BlockSpec((c, self.output_dim),
                                           lambda i: (i, 0))),
                compiler_params=compiler_params,
                cost_estimate=cost,
            )(x_t)
            # Free row-major reshape — no transpose pass over the big output.
            return out2d.reshape(*orig_shape[:-1], self.output_dim)

        out3d = pl.pallas_call(
            functools.partial(_freq_encode_cf_kernel, **kernel_cfg),
            out_shape=jax.ShapeDtypeStruct(
                (self.n_slabs, self.input_dim, n), out_dtype),
            grid_spec=pltpu.PrefetchScalarGridSpec(
                num_scalar_prefetch=0, grid=grid, in_specs=in_specs,
                out_specs=pl.BlockSpec((self.n_slabs, self.input_dim, c),
                                       lambda i: (0, 0, i))),
            compiler_params=compiler_params,
            cost_estimate=cost,
        )(x_t)
        # Channel-first contract: (output_dim, *batch) — free reshape.
        return out3d.reshape(self.output_dim, *orig_shape[:-1])


def _reference(x, enc: FreqEncoder):
    outs = []
    if enc.include_input:
        outs.append(x)
    for f in enc.freq_bands:
        for p_fn in enc.periodic_fns:
            outs.append(p_fn(x * f))
    return jnp.concatenate(outs, axis=-1)


if __name__ == "__main__":
    k0, k1 = jax.random.split(jax.random.PRNGKey(0))
    input_dim, N_freqs, max_freq_log2 = 3, 4, 3

    enc = FreqEncoder(input_dim=input_dim, max_freq_log2=max_freq_log2,
                      N_freqs=N_freqs, log_sampling=True, include_input=True)
    assert enc.output_dim == 27
    assert enc.use_double_angle  # exact-doubling bands -> fast recurrence path

    # Small case (n = 16 points): ragged (n < tile) path, default fused
    # in-kernel-transpose channels_last output.
    x = jax.random.normal(k0, (2, 8, input_dim), dtype=jnp.float32)
    ref = _reference(x, enc)
    out = jax.block_until_ready(enc(x))
    assert out.shape == (2, 8, enc.output_dim), out.shape
    assert jnp.allclose(out, ref, atol=5e-5, rtol=1e-4), "mismatch (channels_last)"

    # Exact sin/cos path (double-angle off) — tighter check.
    enc_exact = FreqEncoder(input_dim=input_dim, max_freq_log2=max_freq_log2,
                            N_freqs=N_freqs, log_sampling=True,
                            include_input=True, use_double_angle=False)
    out_exact = jax.block_until_ready(enc_exact(x))
    assert jnp.allclose(out_exact, ref, atol=1e-5, rtol=1e-5), "mismatch (exact)"

    # Channel-first fast path (no transpose anywhere): (output_dim, *batch).
    out_cf = jax.block_until_ready(enc(x, channels_last=False))
    assert out_cf.shape == (enc.output_dim, 2, 8)
    assert jnp.allclose(out_cf.reshape(enc.output_dim, -1).T,
                        ref.reshape(-1, enc.output_dim),
                        atol=5e-5, rtol=1e-4), "mismatch (channel-first)"

    # bf16 writeback (recommended when tolerable): compute stays f32, the
    # dominant HBM writeback halves.
    out_bf16 = jax.block_until_ready(enc(x, out_dtype=jnp.bfloat16))
    assert out_bf16.dtype == jnp.bfloat16
    assert jnp.allclose(out_bf16.astype(jnp.float32), ref,
                        atol=5e-2, rtol=5e-2), "mismatch (bf16)"

    # Multi-step grid with a ragged last block (also exercises the >=2-step
    # split used for v7x's two TensorCores).
    x2 = jax.random.normal(k1, (2, 300, input_dim), dtype=jnp.float32)
    ref2 = _reference(x2, enc)
    out2 = jax.block_until_ready(enc(x2, block_cols=256))
    assert out2.shape == (2, 300, enc.output_dim)
    assert jnp.allclose(out2, ref2, atol=5e-5, rtol=1e-4), "mismatch (multi-block)"

    print("KERNEL_OK")
</pallas_src>

<mosaic_0001>
module attributes {stable_mosaic.version = 11 : i64} {
  func.func @_freq_encode_cl_kernel(%arg0: i32, %arg1: memref<3x128xf32, #tpu.memory_space<vmem>>, %arg2: memref<128x27xf32, #tpu.memory_space<vmem>>) attributes {dimension_semantics = [#tpu.dimension_semantics<parallel>], iteration_bounds = array<i64: 1>, scalar_prefetch = 0 : i64, scratch_operands = 0 : i64, tpu.core_type = #tpu.core_type<tc>, window_params = [{transform_indices = @transform_0, window_bounds = array<i64: 3, 128>}, {transform_indices = @transform_1, window_bounds = array<i64: 128, 27>}]} {
    %c0 = arith.constant 0 : index
    %c0_0 = arith.constant 0 : index
    %0 = vector.load %arg1[%c0, %c0_0] : memref<3x128xf32, #tpu.memory_space<vmem>>, vector<3x128xf32>
    %1 = math.sin %0 : vector<3x128xf32>
    %2 = math.cos %0 : vector<3x128xf32>
    %3 = arith.mulf %1, %2 : vector<3x128xf32>
    %cst = arith.constant 2.000000e+00 : f32
    %4 = vector.broadcast %cst : f32 to vector<3x128xf32>
    %5 = arith.mulf %4, %3 : vector<3x128xf32>
    %6 = arith.mulf %1, %1 : vector<3x128xf32>
    %cst_1 = arith.constant 2.000000e+00 : f32
    %7 = vector.broadcast %cst_1 : f32 to vector<3x128xf32>
    %8 = arith.mulf %7, %6 : vector<3x128xf32>
    %cst_2 = arith.constant 1.000000e+00 : f32
    %9 = vector.broadcast %cst_2 : f32 to vector<3x128xf32>
    %10 = arith.subf %9, %8 : vector<3x128xf32>
    %11 = arith.mulf %5, %10 : vector<3x128xf32>
    %cst_3 = arith.constant 2.000000e+00 : f32
    %12 = vector.broadcast %cst_3 : f32 to vector<3x128xf32>
    %13 = arith.mulf %12, %11 : vector<3x128xf32>
    %14 = arith.mulf %5, %5 : vector<3x128xf32>
    %cst_4 = arith.constant 2.000000e+00 : f32
    %15 = vector.broadcast %cst_4 : f32 to vector<3x128xf32>
    %16 = arith.mulf %15, %14 : vector<3x128xf32>
    %cst_5 = arith.constant 1.000000e+00 : f32
    %17 = vector.broadcast %cst_5 : f32 to vector<3x128xf32>
    %18 = arith.subf %17, %16 : vector<3x128xf32>
    %19 = arith.mulf %13, %18 : vector<3x128xf32>
    %cst_6 = arith.constant 2.000000e+00 : f32
    %20 = vector.broadcast %cst_6 : f32 to vector<3x128xf32>
    %21 = arith.mulf %20, %19 : vector<3x128xf32>
    %22 = arith.mulf %13, %13 : vector<3x128xf32>
    %cst_7 = arith.constant 2.000000e+00 : f32
    %23 = vector.broadcast %cst_7 : f32 to vector<3x128xf32>
    %24 = arith.mulf %23, %22 : vector<3x128xf32>
    %cst_8 = arith.constant 1.000000e+00 : f32
    %25 = vector.broadcast %cst_8 : f32 to vector<3x128xf32>
    %26 = arith.subf %25, %24 : vector<3x128xf32>
    %27 = tpu.concatenate %0, %1, %2, %5, %10, %13, %18, %21, %26 in 0 : vector<3x128xf32>, vector<3x128xf32>, vector<3x128xf32>, vector<3x128xf32>, vector<3x128xf32>, vector<3x128xf32>, vector<3x128xf32>, vector<3x128xf32>, vector<3x128xf32> -> vector<27x128xf32>
    %28 = tpu.transpose %27, [1, 0] : vector<27x128xf32> -> vector<128x27xf32>
    %c0_9 = arith.constant 0 : index
    %c0_10 = arith.constant 0 : index
    %29 = vector.load %arg2[%c0_9, %c0_10] : memref<128x27xf32, #tpu.memory_space<vmem>>, vector<128x27xf32>
    tpu.vector_store %arg2[%c0_9, %c0_10], %28 {strides = array<i32>} : memref<128x27xf32, #tpu.memory_space<vmem>>, vector<128x27xf32>,
    return
  }
  func.func @transform_0(%arg0: i32) -> (i32, i32) {
    %c0_i32 = arith.constant 0 : i32
    %c0_i32_0 = arith.constant 0 : i32
    return %c0_i32, %arg0 : i32, i32
  }
  func.func @transform_1(%arg0: i32) -> (i32, i32) {
    %c0_i32 = arith.constant 0 : i32
    %c0_i32_0 = arith.constant 0 : i32
    return %arg0, %c0_i32 : i32, i32
  }
}

</mosaic_0001>

<llo_original>
// kernel: tpu_custom_call.1
$region0: #{tpu_custom_call.1}
  #allocation0 [shape = 'u32[]', space=smem, size = 0x4, offset = 0x4, fixed_abs, tag = 'smem constant byte address 0x4 - core index']
  #allocation1 [shape = 'u32[144,128]{1,0:T(1,128)}', space=vmem, size = 0x12000, scoped, tag = 'internal scratch']
  %s0 = inlined_call_operand.hbm [shape: f32[3,16], index: 0, kind: input, shape index: {}]
  %s1 = inlined_call_operand.hbm [shape: f32[16,27], index: 1, kind: output, shape index: {}]
  %s2 = sld [smem:[#allocation0]]
  $region18: #{tpu_custom_call.1} parent=0
    _
  %s4 = ssub.s32 1, %s2
  %s5 = scalar_select 0, %s4, %s2
  $region1: #{tpu_custom_call.1} parent=0
    #allocation2 [shape = 'u8[2048]{0}', space=vmem, size = 0x800, scoped, tag = 'input window, operand 0, single buffered']
    #allocation3 [shape = 's32[1]{0}', space=sflag, size = 0x4, scoped, tag = 'scoped memory for tpu_custom_call.1']
    #allocation4 [shape = 's32[1]{0}', space=sflag, size = 0x4, scoped, tag = 'scoped memory for tpu_custom_call.1']
    #allocation5 [shape = 'u8[65536]{0}', space=vmem, size = 0x10000, scoped, tag = 'output window, operand 0, single buffered']
    %6 = vsyncpa [#allocation3], 0
    %7 = vsyncpa [#allocation4], 0
    // Predicated region
    $region2: #{tpu_custom_call.1} parent=1 // pred_check
      _
    $region3: #{tpu_custom_call.1} parent=1 // pred_check_branch
      %9 = sbr.rel (0) target = $region5
    $region4: #{tpu_custom_call.1} parent=1 // pred_region
      %s11 = ssub.s32 64, 64
      %12 = vsyncadd [#allocation3], %s11
      %s14 = sshll.u32 [#allocation2], 4
      %s15 = int_to_ptr.vmem [resolvable:$true] %s14
      %17 = dma.hbm_to_vmem [thread:$0]  %s0, 64, %s15, [#allocation3]
    $region5: #{tpu_custom_call.1} parent=1 // pred_fallthru
      _
    // Predicated region
    $region6: #{tpu_custom_call.1} parent=1 // pred_check
      _
    $region7: #{tpu_custom_call.1} parent=1 // pred_check_branch
      %19 = sbr.rel (0) target = $region9
    $region8: #{tpu_custom_call.1} parent=1 // pred_region
      %20 = dma.done [#allocation3], 64
    $region9: #{tpu_custom_call.1} parent=1 // pred_fallthru
      _
    %v21 = vld [vmem:[#allocation2] sm:$0x7]
    %v22 = vand.u32 2147483647, %v21
    %vm23 = vcmp.le.f32.partialorder %v22, 0.7853982
    %vm24 = vcmp.lt.s32.totalorder %v21, 0
    %v25 = vand.u32 %v21, 2139095040
    %v26 = vshrl.u32 %v25, 23
    %v27 = vsub.s32 %v26, 127
    %v28 = vand.u32 2147483647, %v21
    %v29 = vand.u32 %v28, 8388607
    %v30 = vor.u32 %v29, 8388608
    %v31 = vsub.s32 0, %v30
    %v32 = vadd.s32 %v27, 1
    %vm33 = vcmp.gt.s32.totalorder %v32, 0
    %v34 = vsel %vm33, %v32, 0
    %v35 = vshrl.u32 %v34, 5
    %v36 = vand.u32 %v34, 31
    %v37 = vsub.s32 32, %v36
    %v38 = vshrl.u32 683565275, %v37
    %v39 = vshll.u32 683565275, %v36
    %v40 = vshrl.u32 2475754826, %v37
    %v41 = vor.u32 %v39, %v40
    %v42 = vshll.u32 2475754826, %v36
    %v43 = vshrl.u32 2131351028, %v37
    %v44 = vor.u32 %v42, %v43
    %v45 = vshll.u32 2131351028, %v36
    %v46 = vshrl.u32 2102212464, %v37
    %v47 = vor.u32 %v45, %v46
    %v48 = vshll.u32 2102212464, %v36
    %v49 = vshrl.u32 920167782, %v37
    %v50 = vor.u32 %v48, %v49
    %v51 = vshll.u32 920167782, %v36
    %v52 = vshrl.u32 1326507024, %v37
    %v53 = vor.u32 %v51, %v52
    %vm54 = vcmp.lt.s32.totalorder %v35, 1
    %vm55 = vcmp.lt.s32.totalorder %v35, 2
    %vm56 = vcmp.lt.s32.totalorder %v35, 3
    %vm57 = vcmp.lt.s32.totalorder %v35, 4
    %v58 = vsel %vm54, %v38, %v41
    %v59 = vsel %vm57, %v47, 2102212464
    %v60 = vsel %vm56, %v44, %v59
    %v61 = vsel %vm55, %v58, %v60
    %v62 = vsel %vm54, %v41, %v44
    %v63 = vsel %vm57, %v50, 920167782
    %v64 = vsel %vm56, %v47, %v63
    %v65 = vsel %vm55, %v62, %v64
    %v66 = vsel %vm54, %v44, %v47
    %v67 = vsel %vm57, %v53, 1326507024
    %v68 = vsel %vm56, %v50, %v67
    %v69 = vsel %vm55, %v66, %v68
    %v70 = vshll.u32 %v30, 8
    %v71 = vmul.u32.u64.compose %v70, %v69
    %v72 = vextract.low.u32 %v71
    %v73 = vextract.high.u32 %v71
    %v74 = vmul.u32.u64.compose %v70, %v65
    %v75 = vextract.low.u32 %v74
    %v76 = vextract.high.u32 %v74
    %v77 = vmul.u32 %v70, %v61
    %v78 = vadd.s32 %v73, %v75
    %vm79 = vc.u32 %v73, %v75
    %v80 = vadd.s32 %v76, 1
    %v81 = vsel %vm79, %v80, %v76
    %v82 = vadd.s32 %v77, %v81
    %v83 = vadd.s32 %v82, 536870912
    %v84 = vshrl.u32 %v83, 30
    %v85 = vshll.u32 %v84, 30
    %v86 = vsub.s32 %v82, %v85
    %vm87 = vcmp.lt.s32.totalorder %v86, 0
    %v88 = vsub.s32 0, %v86
    %v89 = vsel %vm87, %v88, %v86
    %v90 = vclz %v89
    %v91 = vsub.s32 %v90, 2
    %vm92 = vcmp.gt.s32.totalorder 0, %v91
    %v93 = vsel %vm92, 0, %v91
    %v94 = vsub.s32 32, %v93
    %v95 = vshll.u32 %v86, %v93
    %v96 = vshrl.u32 %v78, %v94
    %v97 = vor.u32 %v95, %v96
    %v98 = vsub.s32 4294967266, %v93
    %v99 = vadd.s32 %v98, 127
    %v100 = vshll.u32 %v99, 23
    %v101 = vor.u32 4788187, %v100
    %v102 = vand.u32 2147483647, %v101
    %v104 = vcvt.s32.f32 %v97
    %v105 = vmul.f32 %v104, %v102
    %v106 = vxor.u32 %v105, 2147483648
    %v107 = vsel %vm24, %v106, %v105
    %v108 = vsub.s32 4, %v84
    %v109 = vsel %vm24, %v108, %v84
    %v110 = vsel %vm23, %v21, %v107
    %v111 = vsel %vm23, 0, %v109
    %v112 = vcosq.f32.pop %v110
    %v113 = vsinq.f32.pop %v110
    %vm114 = vweird.f32 %v21
    %v115 = vadd.s32 %v111, 3
    %v116 = vand.u32 %v115, 3
    %vm117 = vcmp.lt.s32.totalorder %v116, 2
    %vm118 = vcmp.eq.s32.totalorder %v116, 0
    %v119 = vxor.u32 %v113, 2147483648
    %v120 = vsel %vm118, %v112, %v119
    %vm121 = vcmp.eq.s32.totalorder %v116, 2
    %v122 = vxor.u32 %v112, 2147483648
    %v123 = vsel %vm121, %v122, %v113
    %v124 = vsel %vm117, %v120, %v123
    %v125 = vsel %vm114, nan, %v124
    %v126 = vand.u32 2147483647, %v21
    %vm127 = vcmp.le.f32.partialorder %v126, 0.7853982
    %vm128 = vcmp.lt.s32.totalorder %v21, 0
    %v129 = vand.u32 %v21, 2139095040
    %v130 = vshrl.u32 %v129, 23
    %v131 = vsub.s32 %v130, 127
    %v132 = vand.u32 2147483647, %v21
    %v133 = vand.u32 %v132, 8388607
    %v134 = vor.u32 %v133, 8388608
    %v135 = vsub.s32 0, %v134
    %v136 = vadd.s32 %v131, 1
    %vm137 = vcmp.gt.s32.totalorder %v136, 0
    %v138 = vsel %vm137, %v136, 0
    %v139 = vshrl.u32 %v138, 5
    %v140 = vand.u32 %v138, 31
    %v141 = vsub.s32 32, %v140
    %v142 = vshrl.u32 683565275, %v141
    %v143 = vshll.u32 683565275, %v140
    %v144 = vshrl.u32 2475754826, %v141
    %v145 = vor.u32 %v143, %v144
    %v146 = vshll.u32 2475754826, %v140
    %v147 = vshrl.u32 2131351028, %v141
    %v148 = vor.u32 %v146, %v147
    %v149 = vshll.u32 2131351028, %v140
    %v150 = vshrl.u32 2102212464, %v141
    %v151 = vor.u32 %v149, %v150
    %v152 = vshll.u32 2102212464, %v140
    %v153 = vshrl.u32 920167782, %v141
    %v154 = vor.u32 %v152, %v153
    %v155 = vshll.u32 920167782, %v140
    %v156 = vshrl.u32 1326507024, %v141
    %v157 = vor.u32 %v155, %v156
    %vm158 = vcmp.lt.s32.totalorder %v139, 1
    %vm159 = vcmp.lt.s32.totalorder %v139, 2
    %vm160 = vcmp.lt.s32.totalorder %v139, 3
    %vm161 = vcmp.lt.s32.totalorder %v139, 4
    %v162 = vsel %vm158, %v142, %v145
    %v163 = vsel %vm161, %v151, 2102212464
    %v164 = vsel %vm160, %v148, %v163
    %v165 = vsel %vm159, %v162, %v164
    %v166 = vsel %vm158, %v145, %v148
    %v167 = vsel %vm161, %v154, 920167782
    %v168 = vsel %vm160, %v151, %v167
    %v169 = vsel %vm159, %v166, %v168
    %v170 = vsel %vm158, %v148, %v151
    %v171 = vsel %vm161, %v157, 1326507024
    %v172 = vsel %vm160, %v154, %v171
    %v173 = vsel %vm159, %v170, %v172
    %v174 = vshll.u32 %v134, 8
    %v175 = vmul.u32.u64.compose %v174, %v173
    %v176 = vextract.low.u32 %v175
    %v177 = vextract.high.u32 %v175
    %v178 = vmul.u32.u64.compose %v174, %v169
    %v179 = vextract.low.u32 %v178
    %v180 = vextract.high.u32 %v178
    %v181 = vmul.u32 %v174, %v165
    %v182 = vadd.s32 %v177, %v179
    %vm183 = vc.u32 %v177, %v179
    %v184 = vadd.s32 %v180, 1
    %v185 = vsel %vm183, %v184, %v180
    %v186 = vadd.s32 %v181, %v185
    %v187 = vadd.s32 %v186, 536870912
    %v188 = vshrl.u32 %v187, 30
    %v189 = vshll.u32 %v188, 30
    %v190 = vsub.s32 %v186, %v189
    %vm191 = vcmp.lt.s32.totalorder %v190, 0
    %v192 = vsub.s32 0, %v190
    %v193 = vsel %vm191, %v192, %v190
    %v194 = vclz %v193
    %v195 = vsub.s32 %v194, 2
    %vm196 = vcmp.gt.s32.totalorder 0, %v195
    %v197 = vsel %vm196, 0, %v195
    %v198 = vsub.s32 32, %v197
    %v199 = vshll.u32 %v190, %v197
    %v200 = vshrl.u32 %v182, %v198
    %v201 = vor.u32 %v199, %v200
    %v202 = vsub.s32 4294967266, %v197
    %v203 = vadd.s32 %v202, 127
    %v204 = vshll.u32 %v203, 23
    %v205 = vor.u32 4788187, %v204
    %v206 = vand.u32 2147483647, %v205
    %v208 = vcvt.s32.f32 %v201
    %v209 = vmul.f32 %v208, %v206
    %v210 = vxor.u32 %v209, 2147483648
    %v211 = vsel %vm128, %v210, %v209
    %v212 = vsub.s32 4, %v188
    %v213 = vsel %vm128, %v212, %v188
    %v214 = vsel %vm127, %v21, %v211
    %v215 = vsel %vm127, 0, %v213
    %v216 = vcosq.f32.pop %v214
    %v217 = vsinq.f32.pop %v214
    %vm218 = vweird.f32 %v21
    %v219 = vand.u32 %v215, 3
    %vm220 = vcmp.lt.s32.totalorder %v219, 2
    %vm221 = vcmp.eq.s32.totalorder %v219, 0
    %v222 = vxor.u32 %v217, 2147483648
    %v223 = vsel %vm221, %v216, %v222
    %vm224 = vcmp.eq.s32.totalorder %v219, 2
    %v225 = vxor.u32 %v216, 2147483648
    %v226 = vsel %vm224, %v225, %v217
    %v227 = vsel %vm220, %v223, %v226
    %v228 = vsel %vm218, nan, %v227
    %v229 = vmul.f32 %v125, %v228
    %v230 = vmul.f32 %v229, 2.0
    %v231 = vmul.f32 %v125, %v125
    %v232 = vmul.f32 %v231, 2.0
    %v233 = vsub.f32 1.0, %v232
    %v234 = vmul.f32 %v230, %v233
    %v235 = vmul.f32 %v234, 2.0
    %v236 = vmul.f32 %v230, %v230
    %v237 = vmul.f32 %v236, 2.0
    %v238 = vsub.f32 1.0, %v237
    %v239 = vmul.f32 %v235, %v238
    %v240 = vmul.f32 %v239, 2.0
    %v241 = vmul.f32 %v235, %v235
    %v242 = vmul.f32 %v241, 2.0
    %v243 = vsub.f32 1.0, %v242
    %v245 = vrot.slane %v125, 5
    %v248 = vrot.slane %v228, 2
    %v251 = vrot.slane %v230, 7
    %v254 = vrot.slane %v233, 4
    %v257 = vrot.slane %v235, 1
    %v260 = vrot.slane %v238, 6
    %v263 = vrot.slane %v240, 3
    %vm265 = vcmask 1042432
    %v266 = vsel %vm265, %v21, %v245
    %vm267 = vcmask 1045504
    %v268 = vsel %vm267, %v266, %v248
    %vm269 = vcmask 1040384
    %v270 = vsel %vm269, %v248, %v251
    %vm271 = vcmask 1043456
    %v272 = vsel %vm271, %v270, %v254
    %vm273 = vcmask 1046528
    %v274 = vsel %vm273, %v272, %v257
    %vm275 = vcmask 1041408
    %v276 = vsel %vm275, %v257, %v260
    %vm277 = vcmask 1044480
    %v278 = vsel %vm277, %v276, %v263
    %279 = vxpose.xlu0.b32.start [1/16] %v268, 128
    %280 = vxpose.xlu0.b32.cont [2/16] %v274, 128
    %281 = vxpose.xlu0.b32.cont [3/16] %v278, 128
    %282 = vxpose.xlu0.b32.cont [4/16] %v243, 128
    %283 = vxpose.xlu0.b32.cont [5/16] 0.0, 128
    %284 = vxpose.xlu0.b32.cont [6/16] 0.0, 128
    %285 = vxpose.xlu0.b32.cont [7/16] 0.0, 128
    %286 = vxpose.xlu0.b32.cont [8/16] 0.0, 128
    %287 = vxpose.xlu0.b32.cont [9/16] 0.0, 128
    %288 = vxpose.xlu0.b32.cont [10/16] 0.0, 128
    %289 = vxpose.xlu0.b32.cont [11/16] 0.0, 128
    %290 = vxpose.xlu0.b32.cont [12/16] 0.0, 128
    %291 = vxpose.xlu0.b32.cont [13/16] 0.0, 128
    %292 = vxpose.xlu0.b32.cont [14/16] 0.0, 128
    %293 = vxpose.xlu0.b32.cont [15/16] 0.0, 128
    %294 = vxpose.xlu0.b32.end [16/16] 0.0, 128
    %v295 = vpop.trf.xlu0
    %v296 = vpop.trf.xlu0
    %v297 = vpop.trf.xlu0
    %v298 = vpop.trf.xlu0
    %v299 = vpop.trf.xlu0
    %v300 = vpop.trf.xlu0
    %v301 = vpop.trf.xlu0
    %v302 = vpop.trf.xlu0
    %v303 = vpop.trf.xlu0
    %v304 = vpop.trf.xlu0
    %v305 = vpop.trf.xlu0
    %v306 = vpop.trf.xlu0
    %v307 = vpop.trf.xlu0
    %v308 = vpop.trf.xlu0
    %v309 = vpop.trf.xlu0
    %v310 = vpop.trf.xlu0
    %vm311 = vcmask 220160
    %312 = vst.msk [vmem:[#allocation5] sm:$0xff] %vm311, %v295
    %313 = vst.msk [vmem:[#allocation5 + $0x8] sm:$0xff] %vm311, %v296
    %314 = vst.msk [vmem:[#allocation5 + $0x10] sm:$0xff] %vm311, %v297
    %315 = vst.msk [vmem:[#allocation5 + $0x18] sm:$0xff] %vm311, %v298
    %316 = vst.msk [vmem:[#allocation5 + $0x20] sm:$0xff] %vm311, %v299
    %317 = vst.msk [vmem:[#allocation5 + $0x28] sm:$0xff] %vm311, %v300
    %318 = vst.msk [vmem:[#allocation5 + $0x30] sm:$0xff] %vm311, %v301
    %319 = vst.msk [vmem:[#allocation5 + $0x38] sm:$0xff] %vm311, %v302
    %320 = vst.msk [vmem:[#allocation5 + $0x40] sm:$0xff] %vm311, %v303
    %321 = vst.msk [vmem:[#allocation5 + $0x48] sm:$0xff] %vm311, %v304
    %322 = vst.msk [vmem:[#allocation5 + $0x50] sm:$0xff] %vm311, %v305
    %323 = vst.msk [vmem:[#allocation5 + $0x58] sm:$0xff] %vm311, %v306
    %324 = vst.msk [vmem:[#allocation5 + $0x60] sm:$0xff] %vm311, %v307
    %325 = vst.msk [vmem:[#allocation5 + $0x68] sm:$0xff] %vm311, %v308
    %326 = vst.msk [vmem:[#allocation5 + $0x70] sm:$0xff] %vm311, %v309
    %327 = vst.msk [vmem:[#allocation5 + $0x78] sm:$0xff] %vm311, %v310
    // Predicated region
    $region10: #{tpu_custom_call.1} parent=1 // pred_check
      _
    $region11: #{tpu_custom_call.1} parent=1 // pred_check_branch
      %329 = sbr.rel (0) target = $region13
    $region12: #{tpu_custom_call.1} parent=1 // pred_region
      %s331 = ssub.s32 2048, 256
      %332 = vsyncadd [#allocation4], %s331
      %s333 = sshll.u32 [#allocation5], 4
      %s334 = int_to_ptr.vmem [resolvable:$true] %s333
      %339 = dma.vmem_to_hbm [thread:$0]  %s334, 256, %s1, [#allocation4], 128, 128, 8
    $region13: #{tpu_custom_call.1} parent=1 // pred_fallthru
      _
    // Predicated region
    $region14: #{tpu_custom_call.1} parent=1 // pred_check
      _
    $region15: #{tpu_custom_call.1} parent=1 // pred_check_branch
      %341 = sbr.rel (0) target = $region17
    $region16: #{tpu_custom_call.1} parent=1 // pred_region
      %342 = dma.done [#allocation4], 2048
    $region17: #{tpu_custom_call.1} parent=1 // pred_fallthru
      _
    %343 = vsyncpa [#allocation3], 1
    %344 = vsyncpa [#allocation4], 1

</llo_original>
